<compile_context>
chip_gen: v6e
topology: v6e:2x2x1
jax: 0.10.0
libtpu: 0.0.40
codegen_flags: <defaults>
</compile_context>

<pallas_src>
import jax
import jax.numpy as jnp
from jax import lax
from jax.experimental import pallas as pl
from jax.experimental.pallas import tpu as pltpu


def _round_up(x, m):
    return (x + m - 1) // m * m


def head_forward(x_nchw, w1, b1, w2, b2, *, bt_cap=8, vmem_budget_bytes=8 << 20):
    """x_nchw: (B, Cin, H, W) float32.
    w1: (Cout, Cin, 3, 3) (PyTorch OIHW), b1: (Cout,)
    w2: (Cout, Cout)      (1x1 conv weight, squeezed), b2: (Cout,)
    Returns (B, Cout, H, W), matching the PyTorch module."""
    B, Cin, H, W = x_nchw.shape
    Cout = w1.shape[0]
    HW = H * W

    # --- alignment / padding (wrapper side, all cheap) -----------------------
    HW_p = _round_up(HW, 128)      # lane-dense output
    Cin_p = _round_up(Cin, 8)      # sublane-aligned im2col taps

    # Batch-group size per grid step, from a rough per-step VMEM budget:
    # double-buffered in/out blocks + live intermediates (3 row-group taps + h).
    per_image_bytes = (2 * (Cin_p + Cout) + 3 * Cin_p + 2 * Cout) * HW_p * 4
    Bt = int(max(1, min(B, bt_cap, vmem_budget_bytes // max(per_image_bytes, 1))))
    B_p = _round_up(B, Bt)

    x_flat = x_nchw.reshape(B, Cin, HW)
    x_flat = jnp.pad(x_flat, ((0, B_p - B), (0, Cin_p - Cin), (0, HW_p - HW)))

    # 3x3 weight reordered to (ky, Cout, kx, Cin) so each row-group g=ky is a
    # contiguous (Cout, 3*Cin_p) matrix whose K order matches the tap build
    # (kx-major, cin-minor). Padded Cin rows are zero.
    w1t = jnp.transpose(w1, (2, 0, 3, 1))                         # (3, Cout, 3, Cin)
    w1t = jnp.pad(w1t, ((0, 0), (0, 0), (0, 0), (0, Cin_p - Cin)))
    w1g = w1t.reshape(3, Cout, 3 * Cin_p).astype(jnp.float32)

    b1_2d = b1.reshape(Cout, 1).astype(jnp.float32)
    b2_2d = b2.reshape(Cout, 1).astype(jnp.float32)
    w2_2d = w2.astype(jnp.float32)

    # Precomputed border masks (one row per tap), fetched once per grid step:
    # replaces per-step iota + integer divide + compare/select chains.
    pos = jnp.arange(HW_p, dtype=jnp.int32)
    row = pos // W
    col = pos % W
    mask_rows = []
    for oy in (-1, 0, 1):
        for ox in (-1, 0, 1):
            m = jnp.ones((HW_p,), jnp.bool_)
            if oy == -1:
                m = m & (row >= 1)
            if oy == 1:
                m = m & (row <= H - 2)
            if ox == -1:
                m = m & (col >= 1)
            if ox == 1:
                m = m & (col <= W - 2)
            mask_rows.append(m)
    masks = jnp.stack(mask_rows).astype(jnp.float32)               # (9, HW_p)

    # --- kernel --------------------------------------------------------------
    def kernel(x_ref, w1g_ref, b1_ref, w2_ref, b2_ref, mask_ref, out_ref):
        # x_ref   : (Bt, Cin_p, HW_p)   spatial on lanes (lane-dense)
        # w1g_ref : (3, Cout, 3*Cin_p)  per-row-group 3x3 weights
        # b1_ref  : (Cout, 1)
        # w2_ref  : (Cout, Cout)
        # b2_ref  : (Cout, 1)
        # mask_ref: (9, HW_p)           precomputed border masks (0/1)
        # out_ref : (Bt, Cout, HW_p)    lane-dense output
        x_all = x_ref[...]
        w1g_v = w1g_ref[...]
        b1_v = b1_ref[...]
        w2_v = w2_ref[...]
        b2_v = b2_ref[...]
        mk = mask_ref[...]

        for b in range(Bt):                       # static unroll, small Bt
            x2d = x_all[b]                        # (Cin_p, HW_p)
            acc = None
            # Three row-group matmuls (K = 3*Cin_p each) accumulated in f32:
            # live im2col footprint is 3x the input, not 9x.
            for gi, oy in enumerate((-1, 0, 1)):
                taps = []
                for xi, ox in enumerate((-1, 0, 1)):
                    t = gi * 3 + xi
                    s = oy * W + ox               # flat offset of the tap
                    if s == 0:
                        shifted = x2d
                    else:
                        # shifted[p] = x2d[p + s]; wrapped values masked below.
                        shifted = pltpu.roll(x2d, shift=(-s) % HW_p, axis=1)
                    if not (oy == 0 and ox == 0):
                        shifted = shifted * mk[t:t + 1]   # (1, HW_p) broadcast
                    taps.append(shifted)
                pg = jnp.concatenate(taps, axis=0)        # (3*Cin_p, HW_p)
                part = jnp.dot(w1g_v[gi], pg,
                               preferred_element_type=jnp.float32)
                acc = part if acc is None else acc + part

            h = jnp.maximum(acc + b1_v, 0.0)              # (Cout, HW_p)
            out = jnp.dot(w2_v, h, preferred_element_type=jnp.float32) + b2_v
            out_ref[b] = out.astype(out_ref.dtype)

    grid = (B_p // Bt,)
    out_flat = pl.pallas_call(
        kernel,
        out_shape=jax.ShapeDtypeStruct((B_p, Cout, HW_p), jnp.float32),
        grid_spec=pltpu.PrefetchScalarGridSpec(
            num_scalar_prefetch=0,
            grid=grid,
            in_specs=[
                pl.BlockSpec((Bt, Cin_p, HW_p), lambda i: (i, 0, 0)),
                pl.BlockSpec((3, Cout, 3 * Cin_p), lambda i: (0, 0, 0)),
                pl.BlockSpec((Cout, 1), lambda i: (0, 0)),
                pl.BlockSpec((Cout, Cout), lambda i: (0, 0)),
                pl.BlockSpec((Cout, 1), lambda i: (0, 0)),
                pl.BlockSpec((9, HW_p), lambda i: (0, 0)),
            ],
            out_specs=pl.BlockSpec((Bt, Cout, HW_p), lambda i: (i, 0, 0)),
        ),
        compiler_params=pltpu.CompilerParams(
            dimension_semantics=("parallel",),
            vmem_limit_bytes=32 * 1024 * 1024,
        ),
    )(x_flat, w1g, b1_2d, w2_2d, b2_2d, masks)

    return out_flat[:B, :, :HW].reshape(B, Cout, H, W)


def reference_forward(x_nchw, w1, b1, w2, b2):
    """Pure-JAX reference (lax.conv) with identical semantics, for validation."""
    y = lax.conv_general_dilated(
        x_nchw, w1, window_strides=(1, 1), padding="SAME",
        dimension_numbers=("NCHW", "OIHW", "NCHW"))
    y = jnp.maximum(y + b1.reshape(1, -1, 1, 1), 0.0)
    w2_oihw = w2.reshape(w2.shape[0], w2.shape[1], 1, 1)
    z = lax.conv_general_dilated(
        y, w2_oihw, window_strides=(1, 1), padding="SAME",
        dimension_numbers=("NCHW", "OIHW", "NCHW"))
    return z + b2.reshape(1, -1, 1, 1)


if __name__ == "__main__":
    B, Cin, Cout, H, W = 2, 4, 8, 16, 16

    key = jax.random.PRNGKey(0)
    k_x, k_w1, k_b1, k_w2, k_b2 = jax.random.split(key, 5)

    x = jax.random.normal(k_x, (B, Cin, H, W), dtype=jnp.float32)
    # PyTorch-layout weights: Conv1 (Cout, Cin, 3, 3); Conv2 (1x1) squeezed to (Cout, Cout).
    w1 = jax.random.normal(k_w1, (Cout, Cin, 3, 3), dtype=jnp.float32) * 0.1
    b1 = jax.random.normal(k_b1, (Cout,), dtype=jnp.float32) * 0.1
    w2 = jax.random.normal(k_w2, (Cout, Cout), dtype=jnp.float32) * 0.1
    b2 = jax.random.normal(k_b2, (Cout,), dtype=jnp.float32) * 0.1

    out = head_forward(x, w1, b1, w2, b2)
    jax.block_until_ready(out)

    ref = reference_forward(x, w1, b1, w2, b2)
    assert out.shape == (B, Cout, H, W)
    assert jnp.allclose(out, ref, atol=1e-4, rtol=1e-4), "mismatch vs reference"

    print("KERNEL_OK")
</pallas_src>

<mosaic_0001>
module attributes {stable_mosaic.version = 11 : i64} {
  func.func @kernel(%arg0: i32, %arg1: memref<2x8x256xf32, #tpu.memory_space<vmem>>, %arg2: memref<3x8x24xf32, #tpu.memory_space<vmem>>, %arg3: memref<8x1xf32, #tpu.memory_space<vmem>>, %arg4: memref<8x8xf32, #tpu.memory_space<vmem>>, %arg5: memref<8x1xf32, #tpu.memory_space<vmem>>, %arg6: memref<9x256xf32, #tpu.memory_space<vmem>>, %arg7: memref<2x8x256xf32, #tpu.memory_space<vmem>>) attributes {dimension_semantics = [#tpu.dimension_semantics<parallel>], iteration_bounds = array<i64: 1>, scalar_prefetch = 0 : i64, scratch_operands = 0 : i64, tpu.core_type = #tpu.core_type<tc>, window_params = [{transform_indices = @transform_0, window_bounds = array<i64: 2, 8, 256>}, {pipeline_mode = #tpu.pipeline_mode<synchronous>, transform_indices = @transform_1, window_bounds = array<i64: 3, 8, 24>}, {pipeline_mode = #tpu.pipeline_mode<synchronous>, transform_indices = @transform_2, window_bounds = array<i64: 8, 1>}, {pipeline_mode = #tpu.pipeline_mode<synchronous>, transform_indices = @transform_3, window_bounds = array<i64: 8, 8>}, {pipeline_mode = #tpu.pipeline_mode<synchronous>, transform_indices = @transform_4, window_bounds = array<i64: 8, 1>}, {pipeline_mode = #tpu.pipeline_mode<synchronous>, transform_indices = @transform_5, window_bounds = array<i64: 9, 256>}, {transform_indices = @transform_6, window_bounds = array<i64: 2, 8, 256>}]} {
    %c0 = arith.constant 0 : index
    %c0_0 = arith.constant 0 : index
    %c0_1 = arith.constant 0 : index
    %0 = vector.load %arg1[%c0, %c0_0, %c0_1] : memref<2x8x256xf32, #tpu.memory_space<vmem>>, vector<2x8x256xf32>
    %c0_2 = arith.constant 0 : index
    %c0_3 = arith.constant 0 : index
    %c0_4 = arith.constant 0 : index
    %1 = vector.load %arg2[%c0_2, %c0_3, %c0_4] : memref<3x8x24xf32, #tpu.memory_space<vmem>>, vector<3x8x24xf32>
    %c0_5 = arith.constant 0 : index
    %c0_6 = arith.constant 0 : index
    %2 = vector.load %arg3[%c0_5, %c0_6] : memref<8x1xf32, #tpu.memory_space<vmem>>, vector<8x1xf32>
    %c0_7 = arith.constant 0 : index
    %c0_8 = arith.constant 0 : index
    %3 = vector.load %arg4[%c0_7, %c0_8] : memref<8x8xf32, #tpu.memory_space<vmem>>, vector<8x8xf32>
    %c0_9 = arith.constant 0 : index
    %c0_10 = arith.constant 0 : index
    %4 = vector.load %arg5[%c0_9, %c0_10] : memref<8x1xf32, #tpu.memory_space<vmem>>, vector<8x1xf32>
    %c0_11 = arith.constant 0 : index
    %c0_12 = arith.constant 0 : index
    %5 = vector.load %arg6[%c0_11, %c0_12] : memref<9x256xf32, #tpu.memory_space<vmem>>, vector<9x256xf32>
    %6 = vector.extract_strided_slice %0 {offsets = [0, 0, 0], sizes = [1, 8, 256], strides = [1, 1, 1]} : vector<2x8x256xf32> to vector<1x8x256xf32>
    %7 = vector.shape_cast %6 : vector<1x8x256xf32> to vector<8x256xf32>
    %c17_i32 = arith.constant 17 : i32
    %8 = tpu.dynamic_rotate %7 by %c17_i32 dim 1 : vector<8x256xf32>, i32 -> vector<8x256xf32>
    %9 = vector.extract_strided_slice %5 {offsets = [0, 0], sizes = [1, 256], strides = [1, 1]} : vector<9x256xf32> to vector<1x256xf32>
    %10 = vector.broadcast %9 : vector<1x256xf32> to vector<8x256xf32>
    %11 = arith.mulf %8, %10 : vector<8x256xf32>
    %c16_i32 = arith.constant 16 : i32
    %12 = tpu.dynamic_rotate %7 by %c16_i32 dim 1 : vector<8x256xf32>, i32 -> vector<8x256xf32>
    %13 = vector.extract_strided_slice %5 {offsets = [1, 0], sizes = [1, 256], strides = [1, 1]} : vector<9x256xf32> to vector<1x256xf32>
    %14 = vector.broadcast %13 : vector<1x256xf32> to vector<8x256xf32>
    %15 = arith.mulf %12, %14 : vector<8x256xf32>
    %c15_i32 = arith.constant 15 : i32
    %16 = tpu.dynamic_rotate %7 by %c15_i32 dim 1 : vector<8x256xf32>, i32 -> vector<8x256xf32>
    %17 = vector.extract_strided_slice %5 {offsets = [2, 0], sizes = [1, 256], strides = [1, 1]} : vector<9x256xf32> to vector<1x256xf32>
    %18 = vector.broadcast %17 : vector<1x256xf32> to vector<8x256xf32>
    %19 = arith.mulf %16, %18 : vector<8x256xf32>
    %20 = tpu.concatenate %11, %15, %19 in 0 : vector<8x256xf32>, vector<8x256xf32>, vector<8x256xf32> -> vector<24x256xf32>
    %21 = vector.extract_strided_slice %1 {offsets = [0, 0, 0], sizes = [1, 8, 24], strides = [1, 1, 1]} : vector<3x8x24xf32> to vector<1x8x24xf32>
    %22 = vector.shape_cast %21 : vector<1x8x24xf32> to vector<8x24xf32>
    %cst = arith.constant dense<0.000000e+00> : vector<8x256xf32>
    %23 = tpu.matmul %22, %20, %cst {dimension_numbers = #tpu.dot_dimension_numbers<[1], [0], [0], [1], [0, 0, 1, 1], [], []>} : vector<8x24xf32>, vector<24x256xf32>, vector<8x256xf32> -> vector<8x256xf32>
    %c1_i32 = arith.constant 1 : i32
    %24 = tpu.dynamic_rotate %7 by %c1_i32 dim 1 : vector<8x256xf32>, i32 -> vector<8x256xf32>
    %25 = vector.extract_strided_slice %5 {offsets = [3, 0], sizes = [1, 256], strides = [1, 1]} : vector<9x256xf32> to vector<1x256xf32>
    %26 = vector.broadcast %25 : vector<1x256xf32> to vector<8x256xf32>
    %27 = arith.mulf %24, %26 : vector<8x256xf32>
    %c255_i32 = arith.constant 255 : i32
    %28 = tpu.dynamic_rotate %7 by %c255_i32 dim 1 : vector<8x256xf32>, i32 -> vector<8x256xf32>
    %29 = vector.extract_strided_slice %5 {offsets = [5, 0], sizes = [1, 256], strides = [1, 1]} : vector<9x256xf32> to vector<1x256xf32>
    %30 = vector.broadcast %29 : vector<1x256xf32> to vector<8x256xf32>
    %31 = arith.mulf %28, %30 : vector<8x256xf32>
    %32 = tpu.concatenate %27, %7, %31 in 0 : vector<8x256xf32>, vector<8x256xf32>, vector<8x256xf32> -> vector<24x256xf32>
    %33 = vector.extract_strided_slice %1 {offsets = [1, 0, 0], sizes = [1, 8, 24], strides = [1, 1, 1]} : vector<3x8x24xf32> to vector<1x8x24xf32>
    %34 = vector.shape_cast %33 : vector<1x8x24xf32> to vector<8x24xf32>
    %cst_13 = arith.constant dense<0.000000e+00> : vector<8x256xf32>
    %35 = tpu.matmul %34, %32, %cst_13 {dimension_numbers = #tpu.dot_dimension_numbers<[1], [0], [0], [1], [0, 0, 1, 1], [], []>} : vector<8x24xf32>, vector<24x256xf32>, vector<8x256xf32> -> vector<8x256xf32>
    %36 = arith.addf %23, %35 : vector<8x256xf32>
    %c241_i32 = arith.constant 241 : i32
    %37 = tpu.dynamic_rotate %7 by %c241_i32 dim 1 : vector<8x256xf32>, i32 -> vector<8x256xf32>
    %38 = vector.extract_strided_slice %5 {offsets = [6, 0], sizes = [1, 256], strides = [1, 1]} : vector<9x256xf32> to vector<1x256xf32>
    %39 = vector.broadcast %38 : vector<1x256xf32> to vector<8x256xf32>
    %40 = arith.mulf %37, %39 : vector<8x256xf32>
    %c240_i32 = arith.constant 240 : i32
    %41 = tpu.dynamic_rotate %7 by %c240_i32 dim 1 : vector<8x256xf32>, i32 -> vector<8x256xf32>
    %42 = vector.extract_strided_slice %5 {offsets = [7, 0], sizes = [1, 256], strides = [1, 1]} : vector<9x256xf32> to vector<1x256xf32>
    %43 = vector.broadcast %42 : vector<1x256xf32> to vector<8x256xf32>
    %44 = arith.mulf %41, %43 : vector<8x256xf32>
    %c239_i32 = arith.constant 239 : i32
    %45 = tpu.dynamic_rotate %7 by %c239_i32 dim 1 : vector<8x256xf32>, i32 -> vector<8x256xf32>
    %46 = vector.extract_strided_slice %5 {offsets = [8, 0], sizes = [1, 256], strides = [1, 1]} : vector<9x256xf32> to vector<1x256xf32>
    %47 = vector.broadcast %46 : vector<1x256xf32> to vector<8x256xf32>
    %48 = arith.mulf %45, %47 : vector<8x256xf32>
    %49 = tpu.concatenate %40, %44, %48 in 0 : vector<8x256xf32>, vector<8x256xf32>, vector<8x256xf32> -> vector<24x256xf32>
    %50 = vector.extract_strided_slice %1 {offsets = [2, 0, 0], sizes = [1, 8, 24], strides = [1, 1, 1]} : vector<3x8x24xf32> to vector<1x8x24xf32>
    %51 = vector.shape_cast %50 : vector<1x8x24xf32> to vector<8x24xf32>
    %cst_14 = arith.constant dense<0.000000e+00> : vector<8x256xf32>
    %52 = tpu.matmul %51, %49, %cst_14 {dimension_numbers = #tpu.dot_dimension_numbers<[1], [0], [0], [1], [0, 0, 1, 1], [], []>} : vector<8x24xf32>, vector<24x256xf32>, vector<8x256xf32> -> vector<8x256xf32>
    %53 = arith.addf %36, %52 : vector<8x256xf32>
    %54 = vector.broadcast %2 : vector<8x1xf32> to vector<8x256xf32>
    %55 = arith.addf %53, %54 : vector<8x256xf32>
    %cst_15 = arith.constant 0.000000e+00 : f32
    %56 = vector.broadcast %cst_15 : f32 to vector<8x256xf32>
    %57 = arith.maximumf %55, %56 : vector<8x256xf32>
    %cst_16 = arith.constant dense<0.000000e+00> : vector<8x256xf32>
    %58 = tpu.matmul %3, %57, %cst_16 {dimension_numbers = #tpu.dot_dimension_numbers<[1], [0], [0], [1], [0, 0, 1, 1], [], []>} : vector<8x8xf32>, vector<8x256xf32>, vector<8x256xf32> -> vector<8x256xf32>
    %59 = vector.broadcast %4 : vector<8x1xf32> to vector<8x256xf32>
    %60 = arith.addf %58, %59 : vector<8x256xf32>
    %c0_17 = arith.constant 0 : index
    %c0_18 = arith.constant 0 : index
    %c0_19 = arith.constant 0 : index
    %61 = vector.load %arg7[%c0_17, %c0_18, %c0_19] : memref<2x8x256xf32, #tpu.memory_space<vmem>>, vector<1x8x256xf32>
    %62 = vector.shape_cast %61 : vector<1x8x256xf32> to vector<8x256xf32>
    %63 = vector.shape_cast %60 : vector<8x256xf32> to vector<1x8x256xf32>
    tpu.vector_store %arg7[%c0_17, %c0_18, %c0_19], %63 {strides = array<i32>} : memref<2x8x256xf32, #tpu.memory_space<vmem>>, vector<1x8x256xf32>,
    %64 = vector.extract_strided_slice %0 {offsets = [1, 0, 0], sizes = [1, 8, 256], strides = [1, 1, 1]} : vector<2x8x256xf32> to vector<1x8x256xf32>
    %65 = vector.shape_cast %64 : vector<1x8x256xf32> to vector<8x256xf32>
    %c17_i32_20 = arith.constant 17 : i32
    %66 = tpu.dynamic_rotate %65 by %c17_i32_20 dim 1 : vector<8x256xf32>, i32 -> vector<8x256xf32>
    %67 = vector.extract_strided_slice %5 {offsets = [0, 0], sizes = [1, 256], strides = [1, 1]} : vector<9x256xf32> to vector<1x256xf32>
    %68 = vector.broadcast %67 : vector<1x256xf32> to vector<8x256xf32>
    %69 = arith.mulf %66, %68 : vector<8x256xf32>
    %c16_i32_21 = arith.constant 16 : i32
    %70 = tpu.dynamic_rotate %65 by %c16_i32_21 dim 1 : vector<8x256xf32>, i32 -> vector<8x256xf32>
    %71 = vector.extract_strided_slice %5 {offsets = [1, 0], sizes = [1, 256], strides = [1, 1]} : vector<9x256xf32> to vector<1x256xf32>
    %72 = vector.broadcast %71 : vector<1x256xf32> to vector<8x256xf32>
    %73 = arith.mulf %70, %72 : vector<8x256xf32>
    %c15_i32_22 = arith.constant 15 : i32
    %74 = tpu.dynamic_rotate %65 by %c15_i32_22 dim 1 : vector<8x256xf32>, i32 -> vector<8x256xf32>
    %75 = vector.extract_strided_slice %5 {offsets = [2, 0], sizes = [1, 256], strides = [1, 1]} : vector<9x256xf32> to vector<1x256xf32>
    %76 = vector.broadcast %75 : vector<1x256xf32> to vector<8x256xf32>
    %77 = arith.mulf %74, %76 : vector<8x256xf32>
    %78 = tpu.concatenate %69, %73, %77 in 0 : vector<8x256xf32>, vector<8x256xf32>, vector<8x256xf32> -> vector<24x256xf32>
    %79 = vector.extract_strided_slice %1 {offsets = [0, 0, 0], sizes = [1, 8, 24], strides = [1, 1, 1]} : vector<3x8x24xf32> to vector<1x8x24xf32>
    %80 = vector.shape_cast %79 : vector<1x8x24xf32> to vector<8x24xf32>
    %cst_23 = arith.constant dense<0.000000e+00> : vector<8x256xf32>
    %81 = tpu.matmul %80, %78, %cst_23 {dimension_numbers = #tpu.dot_dimension_numbers<[1], [0], [0], [1], [0, 0, 1, 1], [], []>} : vector<8x24xf32>, vector<24x256xf32>, vector<8x256xf32> -> vector<8x256xf32>
    %c1_i32_24 = arith.constant 1 : i32
    %82 = tpu.dynamic_rotate %65 by %c1_i32_24 dim 1 : vector<8x256xf32>, i32 -> vector<8x256xf32>
    %83 = vector.extract_strided_slice %5 {offsets = [3, 0], sizes = [1, 256], strides = [1, 1]} : vector<9x256xf32> to vector<1x256xf32>
    %84 = vector.broadcast %83 : vector<1x256xf32> to vector<8x256xf32>
    %85 = arith.mulf %82, %84 : vector<8x256xf32>
    %c255_i32_25 = arith.constant 255 : i32
    %86 = tpu.dynamic_rotate %65 by %c255_i32_25 dim 1 : vector<8x256xf32>, i32 -> vector<8x256xf32>
    %87 = vector.extract_strided_slice %5 {offsets = [5, 0], sizes = [1, 256], strides = [1, 1]} : vector<9x256xf32> to vector<1x256xf32>
    %88 = vector.broadcast %87 : vector<1x256xf32> to vector<8x256xf32>
    %89 = arith.mulf %86, %88 : vector<8x256xf32>
    %90 = tpu.concatenate %85, %65, %89 in 0 : vector<8x256xf32>, vector<8x256xf32>, vector<8x256xf32> -> vector<24x256xf32>
    %91 = vector.extract_strided_slice %1 {offsets = [1, 0, 0], sizes = [1, 8, 24], strides = [1, 1, 1]} : vector<3x8x24xf32> to vector<1x8x24xf32>
    %92 = vector.shape_cast %91 : vector<1x8x24xf32> to vector<8x24xf32>
    %cst_26 = arith.constant dense<0.000000e+00> : vector<8x256xf32>
    %93 = tpu.matmul %92, %90, %cst_26 {dimension_numbers = #tpu.dot_dimension_numbers<[1], [0], [0], [1], [0, 0, 1, 1], [], []>} : vector<8x24xf32>, vector<24x256xf32>, vector<8x256xf32> -> vector<8x256xf32>
    %94 = arith.addf %81, %93 : vector<8x256xf32>
    %c241_i32_27 = arith.constant 241 : i32
    %95 = tpu.dynamic_rotate %65 by %c241_i32_27 dim 1 : vector<8x256xf32>, i32 -> vector<8x256xf32>
    %96 = vector.extract_strided_slice %5 {offsets = [6, 0], sizes = [1, 256], strides = [1, 1]} : vector<9x256xf32> to vector<1x256xf32>
    %97 = vector.broadcast %96 : vector<1x256xf32> to vector<8x256xf32>
    %98 = arith.mulf %95, %97 : vector<8x256xf32>
    %c240_i32_28 = arith.constant 240 : i32
    %99 = tpu.dynamic_rotate %65 by %c240_i32_28 dim 1 : vector<8x256xf32>, i32 -> vector<8x256xf32>
    %100 = vector.extract_strided_slice %5 {offsets = [7, 0], sizes = [1, 256], strides = [1, 1]} : vector<9x256xf32> to vector<1x256xf32>
    %101 = vector.broadcast %100 : vector<1x256xf32> to vector<8x256xf32>
    %102 = arith.mulf %99, %101 : vector<8x256xf32>
    %c239_i32_29 = arith.constant 239 : i32
    %103 = tpu.dynamic_rotate %65 by %c239_i32_29 dim 1 : vector<8x256xf32>, i32 -> vector<8x256xf32>
    %104 = vector.extract_strided_slice %5 {offsets = [8, 0], sizes = [1, 256], strides = [1, 1]} : vector<9x256xf32> to vector<1x256xf32>
    %105 = vector.broadcast %104 : vector<1x256xf32> to vector<8x256xf32>
    %106 = arith.mulf %103, %105 : vector<8x256xf32>
    %107 = tpu.concatenate %98, %102, %106 in 0 : vector<8x256xf32>, vector<8x256xf32>, vector<8x256xf32> -> vector<24x256xf32>
    %108 = vector.extract_strided_slice %1 {offsets = [2, 0, 0], sizes = [1, 8, 24], strides = [1, 1, 1]} : vector<3x8x24xf32> to vector<1x8x24xf32>
    %109 = vector.shape_cast %108 : vector<1x8x24xf32> to vector<8x24xf32>
    %cst_30 = arith.constant dense<0.000000e+00> : vector<8x256xf32>
    %110 = tpu.matmul %109, %107, %cst_30 {dimension_numbers = #tpu.dot_dimension_numbers<[1], [0], [0], [1], [0, 0, 1, 1], [], []>} : vector<8x24xf32>, vector<24x256xf32>, vector<8x256xf32> -> vector<8x256xf32>
    %111 = arith.addf %94, %110 : vector<8x256xf32>
    %112 = vector.broadcast %2 : vector<8x1xf32> to vector<8x256xf32>
    %113 = arith.addf %111, %112 : vector<8x256xf32>
    %cst_31 = arith.constant 0.000000e+00 : f32
    %114 = vector.broadcast %cst_31 : f32 to vector<8x256xf32>
    %115 = arith.maximumf %113, %114 : vector<8x256xf32>
    %cst_32 = arith.constant dense<0.000000e+00> : vector<8x256xf32>
    %116 = tpu.matmul %3, %115, %cst_32 {dimension_numbers = #tpu.dot_dimension_numbers<[1], [0], [0], [1], [0, 0, 1, 1], [], []>} : vector<8x8xf32>, vector<8x256xf32>, vector<8x256xf32> -> vector<8x256xf32>
    %117 = vector.broadcast %4 : vector<8x1xf32> to vector<8x256xf32>
    %118 = arith.addf %116, %117 : vector<8x256xf32>
    %c1 = arith.constant 1 : index
    %c0_33 = arith.constant 0 : index
    %c0_34 = arith.constant 0 : index
    %119 = vector.load %arg7[%c1, %c0_33, %c0_34] : memref<2x8x256xf32, #tpu.memory_space<vmem>>, vector<1x8x256xf32>
    %120 = vector.shape_cast %119 : vector<1x8x256xf32> to vector<8x256xf32>
    %121 = vector.shape_cast %118 : vector<8x256xf32> to vector<1x8x256xf32>
    tpu.vector_store %arg7[%c1, %c0_33, %c0_34], %121 {strides = array<i32>} : memref<2x8x256xf32, #tpu.memory_space<vmem>>, vector<1x8x256xf32>,
    return
  }
  func.func @transform_0(%arg0: i32) -> (i32, i32, i32) {
    %c0_i32 = arith.constant 0 : i32
    %c0_i32_0 = arith.constant 0 : i32
    %c0_i32_1 = arith.constant 0 : i32
    return %arg0, %c0_i32, %c0_i32_0 : i32, i32, i32
  }
  func.func @transform_1(%arg0: i32) -> (i32, i32, i32) {
    %c0_i32 = arith.constant 0 : i32
    %c0_i32_0 = arith.constant 0 : i32
    %c0_i32_1 = arith.constant 0 : i32
    %c0_i32_2 = arith.constant 0 : i32
    return %c0_i32, %c0_i32_0, %c0_i32_1 : i32, i32, i32
  }
  func.func @transform_2(%arg0: i32) -> (i32, i32) {
    %c0_i32 = arith.constant 0 : i32
    %c0_i32_0 = arith.constant 0 : i32
    %c0_i32_1 = arith.constant 0 : i32
    return %c0_i32, %c0_i32_0 : i32, i32
  }
  func.func @transform_3(%arg0: i32) -> (i32, i32) {
    %c0_i32 = arith.constant 0 : i32
    %c0_i32_0 = arith.constant 0 : i32
    %c0_i32_1 = arith.constant 0 : i32
    return %c0_i32, %c0_i32_0 : i32, i32
  }
  func.func @transform_4(%arg0: i32) -> (i32, i32) {
    %c0_i32 = arith.constant 0 : i32
    %c0_i32_0 = arith.constant 0 : i32
    %c0_i32_1 = arith.constant 0 : i32
    return %c0_i32, %c0_i32_0 : i32, i32
  }
  func.func @transform_5(%arg0: i32) -> (i32, i32) {
    %c0_i32 = arith.constant 0 : i32
    %c0_i32_0 = arith.constant 0 : i32
    %c0_i32_1 = arith.constant 0 : i32
    return %c0_i32, %c0_i32_0 : i32, i32
  }
  func.func @transform_6(%arg0: i32) -> (i32, i32, i32) {
    %c0_i32 = arith.constant 0 : i32
    %c0_i32_0 = arith.constant 0 : i32
    %c0_i32_1 = arith.constant 0 : i32
    return %arg0, %c0_i32, %c0_i32_0 : i32, i32, i32
  }
}

</mosaic_0001>

<llo_original>
// kernel: tpu_custom_call.1
$region0: #{tpu_custom_call.1}
  #allocation0 [shape = 'u32[]', space=smem, size = 0x4, offset = 0x4, fixed_abs, tag = 'smem constant byte address 0x4 - core index']
  #allocation1 [shape = 'u32[144,128]{1,0:T(1,128)}', space=vmem, size = 0x12000, scoped, tag = 'internal scratch']
  %s0 = inlined_call_operand.hbm [shape: f32[2,8,256], index: 0, kind: input, shape index: {}]
  %s1 = inlined_call_operand.hbm [shape: f32[3,8,24], index: 1, kind: input, shape index: {}]
  %s2 = inlined_call_operand.vmem [shape: f32[8,1], index: 2, kind: input, shape index: {}]
  %s3 = inlined_call_operand.vmem [shape: f32[8,8], index: 3, kind: input, shape index: {}]
  %s4 = inlined_call_operand.vmem [shape: f32[8,1], index: 4, kind: input, shape index: {}]
  %s5 = inlined_call_operand.hbm [shape: f32[9,256], index: 5, kind: input, shape index: {}]
  %s6 = inlined_call_operand.hbm [shape: f32[2,8,256], index: 6, kind: output, shape index: {}]
  %s7 = sld [smem:[#allocation0]]
  $region46: #{tpu_custom_call.1} parent=0
    _
  %s9 = ssub.s32 1, %s7
  %s10 = scalar_select 0, %s9, %s7
  $region1: #{tpu_custom_call.1} parent=0
    #allocation2 [shape = 'u8[16384]{0}', space=vmem, size = 0x4000, scoped, tag = 'input window, operand 0, single buffered']
    #allocation3 [shape = 's32[1]{0}', space=sflag, size = 0x4, scoped, tag = 'scoped memory for tpu_custom_call.1']
    #allocation4 [shape = 's32[1]{0}', space=sflag, size = 0x4, scoped, tag = 'scoped memory for tpu_custom_call.1']
    #allocation5 [shape = 'u8[12288]{0}', space=vmem, size = 0x3000, scoped, tag = 'input window, operand 1, single buffered']
    #allocation6 [shape = 's32[1]{0}', space=sflag, size = 0x4, scoped, tag = 'scoped memory for tpu_custom_call.1']
    #allocation7 [shape = 'u8[16384]{0}', space=vmem, size = 0x4000, scoped, tag = 'input window, operand 5, single buffered']
    #allocation8 [shape = 'u8[16384]{0}', space=vmem, size = 0x4000, scoped, tag = 'output window, operand 0, single buffered']
    %11 = vsyncpa [#allocation3], 0
    %12 = vsyncpa [#allocation6], 0
    %13 = vsyncpa [#allocation4], 0
    // Predicated region
    $region2: #{tpu_custom_call.1} parent=1 // pred_check
      _
    $region3: #{tpu_custom_call.1} parent=1 // pred_check_branch
      %15 = sbr.rel (0) target = $region5
    $region4: #{tpu_custom_call.1} parent=1 // pred_region
      %s17 = ssub.s32 512, 512
      %18 = vsyncadd [#allocation3], %s17
      %s19 = sshll.u32 [#allocation2], 4
      %s20 = int_to_ptr.vmem [resolvable:$true] %s19
      %25 = dma.hbm_to_vmem [thread:$0]  %s0, 512, %s20, [#allocation3], 256, 256, 16
    $region5: #{tpu_custom_call.1} parent=1 // pred_fallthru
      _
    // Predicated region
    $region6: #{tpu_custom_call.1} parent=1 // pred_check
      _
    $region7: #{tpu_custom_call.1} parent=1 // pred_check_branch
      %27 = sbr.rel (0) target = $region9
    $region8: #{tpu_custom_call.1} parent=1 // pred_region
      %s29 = ssub.s32 384, 384
      %30 = vsyncadd [#allocation6], %s29
      %s31 = sshll.u32 [#allocation5], 4
      %s32 = int_to_ptr.vmem [resolvable:$true] %s31
      %37 = dma.hbm_to_vmem [thread:$0]  %s1, 384, %s32, [#allocation6], 128, 128, 8
    $region9: #{tpu_custom_call.1} parent=1 // pred_fallthru
      _
    // Predicated region
    $region10: #{tpu_custom_call.1} parent=1 // pred_check
      _
    $region11: #{tpu_custom_call.1} parent=1 // pred_check_branch
      %39 = sbr.rel (0) target = $region13
    $region12: #{tpu_custom_call.1} parent=1 // pred_region
      _
    $region13: #{tpu_custom_call.1} parent=1 // pred_fallthru
      _
    // Predicated region
    $region14: #{tpu_custom_call.1} parent=1 // pred_check
      _
    $region15: #{tpu_custom_call.1} parent=1 // pred_check_branch
      %41 = sbr.rel (0) target = $region17
    $region16: #{tpu_custom_call.1} parent=1 // pred_region
      _
    $region17: #{tpu_custom_call.1} parent=1 // pred_fallthru
      _
    // Predicated region
    $region18: #{tpu_custom_call.1} parent=1 // pred_check
      _
    $region19: #{tpu_custom_call.1} parent=1 // pred_check_branch
      %43 = sbr.rel (0) target = $region21
    $region20: #{tpu_custom_call.1} parent=1 // pred_region
      _
    $region21: #{tpu_custom_call.1} parent=1 // pred_fallthru
      _
    // Predicated region
    $region22: #{tpu_custom_call.1} parent=1 // pred_check
      _
    $region23: #{tpu_custom_call.1} parent=1 // pred_check_branch
      %45 = sbr.rel (0) target = $region25
    $region24: #{tpu_custom_call.1} parent=1 // pred_region
      %s47 = ssub.s32 512, 512
      %48 = vsyncadd [#allocation6], %s47
      %s49 = sshll.u32 [#allocation7], 4
      %s50 = int_to_ptr.vmem [resolvable:$true] %s49
      %55 = dma.hbm_to_vmem [thread:$0]  %s5, 512, %s50, [#allocation6], 256, 256, 16
    $region25: #{tpu_custom_call.1} parent=1 // pred_fallthru
      _
    // Predicated region
    $region26: #{tpu_custom_call.1} parent=1 // pred_check
      _
    $region27: #{tpu_custom_call.1} parent=1 // pred_check_branch
      %57 = sbr.rel (0) target = $region29
    $region28: #{tpu_custom_call.1} parent=1 // pred_region
      %58 = dma.done [#allocation3], 512
    $region29: #{tpu_custom_call.1} parent=1 // pred_fallthru
      _
    // Predicated region
    $region30: #{tpu_custom_call.1} parent=1 // pred_check
      _
    $region31: #{tpu_custom_call.1} parent=1 // pred_check_branch
      %60 = sbr.rel (0) target = $region33
    $region32: #{tpu_custom_call.1} parent=1 // pred_region
      %61 = dma.done [#allocation6], 384
    $region33: #{tpu_custom_call.1} parent=1 // pred_fallthru
      _
    // Predicated region
    $region34: #{tpu_custom_call.1} parent=1 // pred_check
      _
    $region35: #{tpu_custom_call.1} parent=1 // pred_check_branch
      %63 = sbr.rel (0) target = $region37
    $region36: #{tpu_custom_call.1} parent=1 // pred_region
      %64 = dma.done [#allocation6], 512
    $region37: #{tpu_custom_call.1} parent=1 // pred_fallthru
      _
    %v65 = vld [vmem:[#allocation2] sm:$0xff]
    %v66 = vld [vmem:[#allocation2 + $0x8] sm:$0xff]
    %v67 = vld [vmem:[#allocation2 + $0x10] sm:$0xff]
    %v68 = vld [vmem:[#allocation2 + $0x18] sm:$0xff]
    %v69 = vld [vmem:[#allocation5] sm:$0xff]
    %v70 = vld [vmem:[#allocation5 + $0x8] sm:$0xff]
    %v71 = vld [vmem:[#allocation5 + $0x10] sm:$0xff]
    %v72 = vld [vmem:[%s2] sm:$0xff]
    %v73 = vld [vmem:[%s3] sm:$0xff]
    %v74 = vld [vmem:[%s4] sm:$0xff]
    %v75 = vld [vmem:[#allocation7] sm:$0xff]
    %v76 = vld [vmem:[#allocation7 + $0x8] sm:$0xff]
    %v77 = vld [vmem:[#allocation7 + $0x10] sm:$0x1]
    %v78 = vld [vmem:[#allocation7 + $0x18] sm:$0x1]
    %79 = vrot.lane.b32.xlu0 %v65, 17
    %v80 = vpop.permute.xlu0 %79
    %81 = vrot.lane.b32.xlu0 %v66, 17
    %v82 = vpop.permute.xlu0 %81
    %v83 = vlaneseq
    %v84 = vand.u32 %v83, 127
    %vm85 = vcmp.lt.s32.totalorder %v84, 17
    %v86 = vsel %vm85, %v80, %v82
    %v87 = vsel %vm85, %v82, %v80
    %v88 = vlaneseq
    %v89 = vshrl.u32 %v88, 7
    %v90 = vsub.s32 0, %v89
    %v91 = vrot.slane %v75, %v90
    %v92 = vlaneseq
    %v93 = vshrl.u32 %v92, 7
    %v94 = vsub.s32 0, %v93
    %v95 = vrot.slane %v76, %v94
    %v96 = vmul.f32 %v87, %v91
    %v97 = vmul.f32 %v86, %v95
    %98 = vrot.lane.b32.xlu0 %v65, 16
    %v99 = vpop.permute.xlu0 %98
    %100 = vrot.lane.b32.xlu0 %v66, 16
    %v101 = vpop.permute.xlu0 %100
    %vm102 = vcmp.lt.s32.totalorder %v84, 16
    %v103 = vsel %vm102, %v99, %v101
    %v104 = vsel %vm102, %v101, %v99
    %v105 = vlaneseq
    %v106 = vshrl.u32 %v105, 7
    %v107 = vsub.s32 1, %v106
    %v108 = vrot.slane %v75, %v107
    %v109 = vlaneseq
    %v110 = vshrl.u32 %v109, 7
    %v111 = vsub.s32 1, %v110
    %v112 = vrot.slane %v76, %v111
    %v113 = vmul.f32 %v104, %v108
    %v114 = vmul.f32 %v103, %v112
    %115 = vrot.lane.b32.xlu0 %v65, 15
    %v116 = vpop.permute.xlu0 %115
    %117 = vrot.lane.b32.xlu0 %v66, 15
    %v118 = vpop.permute.xlu0 %117
    %vm119 = vcmp.lt.s32.totalorder %v84, 15
    %v120 = vsel %vm119, %v116, %v118
    %v121 = vsel %vm119, %v118, %v116
    %v122 = vlaneseq
    %v123 = vshrl.u32 %v122, 7
    %v124 = vsub.s32 2, %v123
    %v125 = vrot.slane %v75, %v124
    %v126 = vlaneseq
    %v127 = vshrl.u32 %v126, 7
    %v128 = vsub.s32 2, %v127
    %v129 = vrot.slane %v76, %v128
    %v130 = vmul.f32 %v121, %v125
    %v131 = vmul.f32 %v120, %v129
    %132 = vrot.lane.b32.xlu0 %v65, 1
    %v133 = vpop.permute.xlu0 %132
    %134 = vrot.lane.b32.xlu0 %v66, 1
    %v135 = vpop.permute.xlu0 %134
    %vm136 = vcmp.lt.s32.totalorder %v84, 1
    %v137 = vsel %vm136, %v133, %v135
    %v138 = vsel %vm136, %v135, %v133
    %v139 = vlaneseq
    %v140 = vshrl.u32 %v139, 7
    %v141 = vsub.s32 3, %v140
    %v142 = vrot.slane %v75, %v141
    %v143 = vlaneseq
    %v144 = vshrl.u32 %v143, 7
    %v145 = vsub.s32 3, %v144
    %v146 = vrot.slane %v76, %v145
    %v147 = vmul.f32 %v138, %v142
    %v148 = vmul.f32 %v137, %v146
    %149 = vrot.lane.b32.xlu0 %v65, 127
    %v150 = vpop.permute.xlu0 %149
    %151 = vrot.lane.b32.xlu0 %v66, 127
    %v152 = vpop.permute.xlu0 %151
    %vm153 = vcmp.lt.s32.totalorder %v84, 127
    %v154 = vsel %vm153, %v150, %v152
    %v155 = vsel %vm153, %v152, %v150
    %v156 = vlaneseq
    %v157 = vshrl.u32 %v156, 7
    %v158 = vsub.s32 5, %v157
    %v159 = vrot.slane %v75, %v158
    %v160 = vlaneseq
    %v161 = vshrl.u32 %v160, 7
    %v162 = vsub.s32 5, %v161
    %v163 = vrot.slane %v76, %v162
    %v164 = vmul.f32 %v154, %v159
    %v165 = vmul.f32 %v155, %v163
    %vm166 = vcmask 195584
    %v168 = vsel %vm166, %v70, 0
    %170 = vmatprep.subr.mxu0 0.0
    %171 = vmatpush1.msra.mxu0 0.0
    %172 = vmatprep.subr.mxu0 0.0
    %173 = vmatpush1.msra.mxu0 0.0
    %174 = vmatprep.subr.mxu0 0.0
    %175 = vmatpush1.msra.mxu0 0.0
    %176 = vmatprep.subr.mxu0 0.0
    %177 = vmatpush1.msra.mxu0 0.0
    %178 = vmatprep.subr.mxu0 0.0
    %179 = vmatpush1.msra.mxu0 0.0
    %180 = vmatprep.subr.mxu0 0.0
    %181 = vmatpush1.msra.mxu0 0.0
    %182 = vmatprep.subr.mxu0 0.0
    %183 = vmatpush1.msra.mxu0 0.0
    %184 = vmatprep.subr.mxu0 0.0
    %185 = vmatpush1.msra.mxu0 0.0
    %186 = vmatprep.subr.mxu0 0.0
    %187 = vmatpush1.msra.mxu0 0.0
    %188 = vmatprep.subr.mxu0 0.0
    %189 = vmatpush1.msra.mxu0 0.0
    %190 = vmatprep.subr.mxu0 0.0
    %191 = vmatpush1.msra.mxu0 0.0
    %192 = vmatprep.subr.mxu0 0.0
    %193 = vmatpush1.msra.mxu0 0.0
    %194 = vmatprep.subr.mxu0 0.0
    %195 = vmatpush1.msra.mxu0 0.0
    %196 = vmatprep.subr.mxu0 %v165
    %197 = vmatpush1.msra.mxu0 %v164
    %198 = vmatprep.subr.mxu0 %v66
    %199 = vmatpush1.msra.mxu0 %v65
    %200 = vmatprep.subr.mxu0 %v148
    %201 = vmatpush1.msra.mxu0 %v147
    %202 = vmatprep.subr.mxu0 0.0
    %203 = vmatpush2.msra.mxu0 0.0
    %204 = vmatprep.subr.mxu0 0.0
    %205 = vmatpush2.msra.mxu0 0.0
    %206 = vmatprep.subr.mxu0 0.0
    %207 = vmatpush2.msra.mxu0 0.0
    %208 = vmatprep.subr.mxu0 0.0
    %209 = vmatpush2.msra.mxu0 0.0
    %210 = vmatprep.subr.mxu0 0.0
    %211 = vmatpush2.msra.mxu0 0.0
    %212 = vmatprep.subr.mxu0 0.0
    %213 = vmatpush2.msra.mxu0 0.0
    %214 = vmatprep.subr.mxu0 0.0
    %215 = vmatpush2.msra.mxu0 0.0
    %216 = vmatprep.subr.mxu0 0.0
    %217 = vmatpush2.msra.mxu0 0.0
    %218 = vmatprep.subr.mxu0 0.0
    %219 = vmatpush2.msra.mxu0 0.0
    %220 = vmatprep.subr.mxu0 0.0
    %221 = vmatpush2.msra.mxu0 0.0
    %222 = vmatprep.subr.mxu0 0.0
    %223 = vmatpush2.msra.mxu0 0.0
    %224 = vmatprep.subr.mxu0 0.0
    %225 = vmatpush2.msra.mxu0 0.0
    %226 = vmatprep.subr.mxu0 0.0
    %227 = vmatpush2.msra.mxu0 0.0
    %228 = vmatprep.subr.mxu0 0.0
    %229 = vmatpush2.msra.mxu0 0.0
    %230 = vmatprep.subr.mxu0 0.0
    %231 = vmatpush2.msra.mxu0 0.0
    %232 = vmatprep.subr.mxu0 0.0
    %233 = vmatpush2.msra.mxu0 0.0
    %234 = vmatprep.mubr.f32.mxu0 0.0
    %235 = vmatmul.mubr.f32.gmra.mxu0 %v168
    %v236 = vpop.f32.mrf.mxu0
    %v237 = vadd.f32 0.0, %v236
    %v238 = vpop.f32.mrf.mxu0
    %v239 = vadd.f32 0.0, %v238
    %240 = vdwg.mxu0
    %v242 = vsel %vm166, %v69, 0
    %244 = vmatprep.subr.mxu0 0.0
    %245 = vmatpush1.msra.mxu0 0.0
    %246 = vmatprep.subr.mxu0 0.0
    %247 = vmatpush1.msra.mxu0 0.0
    %248 = vmatprep.subr.mxu0 0.0
    %249 = vmatpush1.msra.mxu0 0.0
    %250 = vmatprep.subr.mxu0 0.0
    %251 = vmatpush1.msra.mxu0 0.0
    %252 = vmatprep.subr.mxu0 0.0
    %253 = vmatpush1.msra.mxu0 0.0
    %254 = vmatprep.subr.mxu0 0.0
    %255 = vmatpush1.msra.mxu0 0.0
    %256 = vmatprep.subr.mxu0 0.0
    %257 = vmatpush1.msra.mxu0 0.0
    %258 = vmatprep.subr.mxu0 0.0
    %259 = vmatpush1.msra.mxu0 0.0
    %260 = vmatprep.subr.mxu0 0.0
    %261 = vmatpush1.msra.mxu0 0.0
    %262 = vmatprep.subr.mxu0 0.0
    %263 = vmatpush1.msra.mxu0 0.0
    %264 = vmatprep.subr.mxu0 0.0
    %265 = vmatpush1.msra.mxu0 0.0
    %266 = vmatprep.subr.mxu0 0.0
    %267 = vmatpush1.msra.mxu0 0.0
    %268 = vmatprep.subr.mxu0 0.0
    %269 = vmatpush1.msra.mxu0 0.0
    %270 = vmatprep.subr.mxu0 %v131
    %271 = vmatpush1.msra.mxu0 %v130
    %272 = vmatprep.subr.mxu0 %v114
    %273 = vmatpush1.msra.mxu0 %v113
    %274 = vmatprep.subr.mxu0 %v97
    %275 = vmatpush1.msra.mxu0 %v96
    %276 = vmatprep.subr.mxu0 0.0
    %277 = vmatpush2.msra.mxu0 0.0
    %278 = vmatprep.subr.mxu0 0.0
    %279 = vmatpush2.msra.mxu0 0.0
    %280 = vmatprep.subr.mxu0 0.0
    %281 = vmatpush2.msra.mxu0 0.0
    %282 = vmatprep.subr.mxu0 0.0
    %283 = vmatpush2.msra.mxu0 0.0
    %284 = vmatprep.subr.mxu0 0.0
    %285 = vmatpush2.msra.mxu0 0.0
    %286 = vmatprep.subr.mxu0 0.0
    %287 = vmatpush2.msra.mxu0 0.0
    %288 = vmatprep.subr.mxu0 0.0
    %289 = vmatpush2.msra.mxu0 0.0
    %290 = vmatprep.subr.mxu0 0.0
    %291 = vmatpush2.msra.mxu0 0.0
    %292 = vmatprep.subr.mxu0 0.0
    %293 = vmatpush2.msra.mxu0 0.0
    %294 = vmatprep.subr.mxu0 0.0
    %295 = vmatpush2.msra.mxu0 0.0
    %296 = vmatprep.subr.mxu0 0.0
    %297 = vmatpush2.msra.mxu0 0.0
    %298 = vmatprep.subr.mxu0 0.0
    %299 = vmatpush2.msra.mxu0 0.0
    %300 = vmatprep.subr.mxu0 0.0
    %301 = vmatpush2.msra.mxu0 0.0
    %302 = vmatprep.subr.mxu0 0.0
    %303 = vmatpush2.msra.mxu0 0.0
    %304 = vmatprep.subr.mxu0 0.0
    %305 = vmatpush2.msra.mxu0 0.0
    %306 = vmatprep.subr.mxu0 0.0
    %307 = vmatpush2.msra.mxu0 0.0
    %308 = vmatprep.mubr.f32.mxu0 0.0
    %309 = vmatmul.mubr.f32.gmra.mxu0 %v242
    %v310 = vpop.f32.mrf.mxu0
    %v311 = vadd.f32 %v237, %v310
    %v312 = vpop.f32.mrf.mxu0
    %v313 = vadd.f32 %v239, %v312
    %314 = vdwg.mxu0
    %315 = vrot.lane.b32.xlu0 %v65, 113
    %v316 = vpop.permute.xlu0 %315
    %317 = vrot.lane.b32.xlu0 %v66, 113
    %v318 = vpop.permute.xlu0 %317
    %vm319 = vcmp.lt.s32.totalorder %v84, 113
    %v320 = vsel %vm319, %v316, %v318
    %v321 = vsel %vm319, %v318, %v316
    %v322 = vlaneseq
    %v323 = vshrl.u32 %v322, 7
    %v324 = vsub.s32 6, %v323
    %v325 = vrot.slane %v75, %v324
    %v326 = vlaneseq
    %v327 = vshrl.u32 %v326, 7
    %v328 = vsub.s32 6, %v327
    %v329 = vrot.slane %v76, %v328
    %v330 = vmul.f32 %v320, %v325
    %v331 = vmul.f32 %v321, %v329
    %332 = vrot.lane.b32.xlu0 %v65, 112
    %v333 = vpop.permute.xlu0 %332
    %334 = vrot.lane.b32.xlu0 %v66, 112
    %v335 = vpop.permute.xlu0 %334
    %vm336 = vcmp.lt.s32.totalorder %v84, 112
    %v337 = vsel %vm336, %v333, %v335
    %v338 = vsel %vm336, %v335, %v333
    %v339 = vlaneseq
    %v340 = vshrl.u32 %v339, 7
    %v341 = vsub.s32 7, %v340
    %v342 = vrot.slane %v75, %v341
    %v343 = vlaneseq
    %v344 = vshrl.u32 %v343, 7
    %v345 = vsub.s32 7, %v344
    %v346 = vrot.slane %v76, %v345
    %v347 = vmul.f32 %v337, %v342
    %v348 = vmul.f32 %v338, %v346
    %349 = vrot.lane.b32.xlu0 %v65, 111
    %v350 = vpop.permute.xlu0 %349
    %351 = vrot.lane.b32.xlu0 %v66, 111
    %v352 = vpop.permute.xlu0 %351
    %vm353 = vcmp.lt.s32.totalorder %v84, 111
    %v354 = vsel %vm353, %v350, %v352
    %v355 = vsel %vm353, %v352, %v350
    %v356 = vlaneseq
    %v357 = vshrl.u32 %v356, 7
    %v358 = vsub.s32 0, %v357
    %v359 = vrot.slane %v77, %v358
    %v360 = vlaneseq
    %v361 = vshrl.u32 %v360, 7
    %v362 = vsub.s32 0, %v361
    %v363 = vrot.slane %v78, %v362
    %v364 = vmul.f32 %v354, %v359
    %v365 = vmul.f32 %v355, %v363
    %v367 = vsel %vm166, %v71, 0
    %369 = vmatprep.subr.mxu0 0.0
    %370 = vmatpush1.msra.mxu0 0.0
    %371 = vmatprep.subr.mxu0 0.0
    %372 = vmatpush1.msra.mxu0 0.0
    %373 = vmatprep.subr.mxu0 0.0
    %374 = vmatpush1.msra.mxu0 0.0
    %375 = vmatprep.subr.mxu0 0.0
    %376 = vmatpush1.msra.mxu0 0.0
    %377 = vmatprep.subr.mxu0 0.0
    %378 = vmatpush1.msra.mxu0 0.0
    %379 = vmatprep.subr.mxu0 0.0
    %380 = vmatpush1.msra.mxu0 0.0
    %381 = vmatprep.subr.mxu0 0.0
    %382 = vmatpush1.msra.mxu0 0.0
    %383 = vmatprep.subr.mxu0 0.0
    %384 = vmatpush1.msra.mxu0 0.0
    %385 = vmatprep.subr.mxu0 0.0
    %386 = vmatpush1.msra.mxu0 0.0
    %387 = vmatprep.subr.mxu0 0.0
    %388 = vmatpush1.msra.mxu0 0.0
    %389 = vmatprep.subr.mxu0 0.0
    %390 = vmatpush1.msra.mxu0 0.0
    %391 = vmatprep.subr.mxu0 0.0
    %392 = vmatpush1.msra.mxu0 0.0
    %393 = vmatprep.subr.mxu0 0.0
    %394 = vmatpush1.msra.mxu0 0.0
    %395 = vmatprep.subr.mxu0 %v365
    %396 = vmatpush1.msra.mxu0 %v364
    %397 = vmatprep.subr.mxu0 %v348
    %398 = vmatpush1.msra.mxu0 %v347
    %399 = vmatprep.subr.mxu0 %v331
    %400 = vmatpush1.msra.mxu0 %v330
    %401 = vmatprep.subr.mxu0 0.0
    %402 = vmatpush2.msra.mxu0 0.0
    %403 = vmatprep.subr.mxu0 0.0
    %404 = vmatpush2.msra.mxu0 0.0
    %405 = vmatprep.subr.mxu0 0.0
    %406 = vmatpush2.msra.mxu0 0.0
    %407 = vmatprep.subr.mxu0 0.0
    %408 = vmatpush2.msra.mxu0 0.0
    %409 = vmatprep.subr.mxu0 0.0
    %410 = vmatpush2.msra.mxu0 0.0
    %411 = vmatprep.subr.mxu0 0.0
    %412 = vmatpush2.msra.mxu0 0.0
    %413 = vmatprep.subr.mxu0 0.0
    %414 = vmatpush2.msra.mxu0 0.0
    %415 = vmatprep.subr.mxu0 0.0
    %416 = vmatpush2.msra.mxu0 0.0
    %417 = vmatprep.subr.mxu0 0.0
    %418 = vmatpush2.msra.mxu0 0.0
    %419 = vmatprep.subr.mxu0 0.0
    %420 = vmatpush2.msra.mxu0 0.0
    %421 = vmatprep.subr.mxu0 0.0
    %422 = vmatpush2.msra.mxu0 0.0
    %423 = vmatprep.subr.mxu0 0.0
    %424 = vmatpush2.msra.mxu0 0.0
    %425 = vmatprep.subr.mxu0 0.0
    %426 = vmatpush2.msra.mxu0 0.0
    %427 = vmatprep.subr.mxu0 0.0
    %428 = vmatpush2.msra.mxu0 0.0
    %429 = vmatprep.subr.mxu0 0.0
    %430 = vmatpush2.msra.mxu0 0.0
    %431 = vmatprep.subr.mxu0 0.0
    %432 = vmatpush2.msra.mxu0 0.0
    %433 = vmatprep.mubr.f32.mxu0 0.0
    %434 = vmatmul.mubr.f32.gmra.mxu0 %v367
    %v435 = vpop.f32.mrf.mxu0
    %v436 = vadd.f32 0.0, %v435
    %v437 = vpop.f32.mrf.mxu0
    %v438 = vadd.f32 0.0, %v437
    %439 = vdwg.mxu0
    %v440 = vadd.f32 %v311, %v436
    %v441 = vadd.f32 %v313, %v438
    %443 = vset.pattern.permute.xlu0 0
    %444 = vperm.xlu0 %443, %v72
    %v445 = vpop.permute.xlu0 %444
    %v447 = vadd.f32 %v440, %v445
    %v448 = vadd.f32 %v441, %v445
    %v449 = vmax.f32 %v447, 0.0
    %v450 = vmax.f32 %v448, 0.0
    %452 = vset.pattern.permute.xlu0 0
    %453 = vperm.xlu0 %452, %v74
    %v454 = vpop.permute.xlu0 %453
    %vm456 = vcmask 64512
    %v458 = vsel %vm456, %v73, 0
    %460 = vmatprep.subr.mxu0 0.0
    %461 = vmatpush1.msra.mxu0 0.0
    %462 = vmatprep.subr.mxu0 0.0
    %463 = vmatpush1.msra.mxu0 0.0
    %464 = vmatprep.subr.mxu0 0.0
    %465 = vmatpush1.msra.mxu0 0.0
    %466 = vmatprep.subr.mxu0 0.0
    %467 = vmatpush1.msra.mxu0 0.0
    %468 = vmatprep.subr.mxu0 0.0
    %469 = vmatpush1.msra.mxu0 0.0
    %470 = vmatprep.subr.mxu0 0.0
    %471 = vmatpush1.msra.mxu0 0.0
    %472 = vmatprep.subr.mxu0 0.0
    %473 = vmatpush1.msra.mxu0 0.0
    %474 = vmatprep.subr.mxu0 0.0
    %475 = vmatpush1.msra.mxu0 0.0
    %476 = vmatprep.subr.mxu0 0.0
    %477 = vmatpush1.msra.mxu0 0.0
    %478 = vmatprep.subr.mxu0 0.0
    %479 = vmatpush1.msra.mxu0 0.0
    %480 = vmatprep.subr.mxu0 0.0
    %481 = vmatpush1.msra.mxu0 0.0
    %482 = vmatprep.subr.mxu0 0.0
    %483 = vmatpush1.msra.mxu0 0.0
    %484 = vmatprep.subr.mxu0 0.0
    %485 = vmatpush1.msra.mxu0 0.0
    %486 = vmatprep.subr.mxu0 0.0
    %487 = vmatpush1.msra.mxu0 0.0
    %488 = vmatprep.subr.mxu0 0.0
    %489 = vmatpush1.msra.mxu0 0.0
    %490 = vmatprep.subr.mxu0 %v450
    %491 = vmatpush1.msra.mxu0 %v449
    %492 = vmatprep.subr.mxu0 0.0
    %493 = vmatpush2.msra.mxu0 0.0
    %494 = vmatprep.subr.mxu0 0.0
    %495 = vmatpush2.msra.mxu0 0.0
    %496 = vmatprep.subr.mxu0 0.0
    %497 = vmatpush2.msra.mxu0 0.0
    %498 = vmatprep.subr.mxu0 0.0
    %499 = vmatpush2.msra.mxu0 0.0
    %500 = vmatprep.subr.mxu0 0.0
    %501 = vmatpush2.msra.mxu0 0.0
    %502 = vmatprep.subr.mxu0 0.0
    %503 = vmatpush2.msra.mxu0 0.0
    %504 = vmatprep.subr.mxu0 0.0
    %505 = vmatpush2.msra.mxu0 0.0
    %506 = vmatprep.subr.mxu0 0.0
    %507 = vmatpush2.msra.mxu0 0.0
    %508 = vmatprep.subr.mxu0 0.0
    %509 = vmatpush2.msra.mxu0 0.0
    %510 = vmatprep.subr.mxu0 0.0
    %511 = vmatpush2.msra.mxu0 0.0
    %512 = vmatprep.subr.mxu0 0.0
    %513 = vmatpush2.msra.mxu0 0.0
    %514 = vmatprep.subr.mxu0 0.0
    %515 = vmatpush2.msra.mxu0 0.0
    %516 = vmatprep.subr.mxu0 0.0
    %517 = vmatpush2.msra.mxu0 0.0
    %518 = vmatprep.subr.mxu0 0.0
    %519 = vmatpush2.msra.mxu0 0.0
    %520 = vmatprep.subr.mxu0 0.0
    %521 = vmatpush2.msra.mxu0 0.0
    %522 = vmatprep.subr.mxu0 0.0
    %523 = vmatpush2.msra.mxu0 0.0
    %524 = vmatprep.mubr.f32.mxu0 0.0
    %525 = vmatmul.mubr.f32.gmra.mxu0 %v458
    %v526 = vpop.f32.mrf.mxu0
    %v527 = vadd.f32 %v454, %v526
    %v528 = vpop.f32.mrf.mxu0
    %v529 = vadd.f32 %v454, %v528
    %530 = vdwg.mxu0
    %531 = vst [vmem:[#allocation8] sm:$0xff] %v527
    %532 = vst [vmem:[#allocation8 + $0x8] sm:$0xff] %v529
    %533 = vrot.lane.b32.xlu0 %v67, 17
    %v534 = vpop.permute.xlu0 %533
    %535 = vrot.lane.b32.xlu0 %v68, 17
    %v536 = vpop.permute.xlu0 %535
    %v537 = vsel %vm85, %v534, %v536
    %v538 = vsel %vm85, %v536, %v534
    %v539 = vmul.f32 %v538, %v91
    %v540 = vmul.f32 %v537, %v95
    %541 = vrot.lane.b32.xlu0 %v67, 16
    %v542 = vpop.permute.xlu0 %541
    %543 = vrot.lane.b32.xlu0 %v68, 16
    %v544 = vpop.permute.xlu0 %543
    %v545 = vsel %vm102, %v542, %v544
    %v546 = vsel %vm102, %v544, %v542
    %v547 = vmul.f32 %v546, %v108
    %v548 = vmul.f32 %v545, %v112
    %549 = vrot.lane.b32.xlu0 %v67, 15
    %v550 = vpop.permute.xlu0 %549
    %551 = vrot.lane.b32.xlu0 %v68, 15
    %v552 = vpop.permute.xlu0 %551
    %v553 = vsel %vm119, %v550, %v552
    %v554 = vsel %vm119, %v552, %v550
    %v555 = vmul.f32 %v554, %v125
    %v556 = vmul.f32 %v553, %v129
    %557 = vrot.lane.b32.xlu0 %v67, 1
    %v558 = vpop.permute.xlu0 %557
    %559 = vrot.lane.b32.xlu0 %v68, 1
    %v560 = vpop.permute.xlu0 %559
    %v561 = vsel %vm136, %v558, %v560
    %v562 = vsel %vm136, %v560, %v558
    %v563 = vmul.f32 %v562, %v142
    %v564 = vmul.f32 %v561, %v146
    %565 = vrot.lane.b32.xlu0 %v67, 127
    %v566 = vpop.permute.xlu0 %565
    %567 = vrot.lane.b32.xlu0 %v68, 127
    %v568 = vpop.permute.xlu0 %567
    %v569 = vsel %vm153, %v566, %v568
    %v570 = vsel %vm153, %v568, %v566
    %v571 = vmul.f32 %v569, %v159
    %v572 = vmul.f32 %v570, %v163
    %573 = vmatprep.subr.mxu0 0.0
    %574 = vmatpush1.msra.mxu0 0.0
    %575 = vmatprep.subr.mxu0 0.0
    %576 = vmatpush1.msra.mxu0 0.0
    %577 = vmatprep.subr.mxu0 0.0
    %578 = vmatpush1.msra.mxu0 0.0
    %579 = vmatprep.subr.mxu0 0.0
    %580 = vmatpush1.msra.mxu0 0.0
    %581 = vmatprep.subr.mxu0 0.0
    %582 = vmatpush1.msra.mxu0 0.0
    %583 = vmatprep.subr.mxu0 0.0
    %584 = vmatpush1.msra.mxu0 0.0
    %585 = vmatprep.subr.mxu0 0.0
    %586 = vmatpush1.msra.mxu0 0.0
    %587 = vmatprep.subr.mxu0 0.0
    %588 = vmatpush1.msra.mxu0 0.0
    %589 = vmatprep.subr.mxu0 0.0
    %590 = vmatpush1.msra.mxu0 0.0
    %591 = vmatprep.subr.mxu0 0.0
    %592 = vmatpush1.msra.mxu0 0.0
    %593 = vmatprep.subr.mxu0 0.0
    %594 = vmatpush1.msra.mxu0 0.0
    %595 = vmatprep.subr.mxu0 0.0
    %596 = vmatpush1.msra.mxu0 0.0
    %597 = vmatprep.subr.mxu0 0.0
    %598 = vmatpush1.msra.mxu0 0.0
    %599 = vmatprep.subr.mxu0 %v572
    %600 = vmatpush1.msra.mxu0 %v571
    %601 = vmatprep.subr.mxu0 %v68
    %602 = vmatpush1.msra.mxu0 %v67
    %603 = vmatprep.subr.mxu0 %v564
    %604 = vmatpush1.msra.mxu0 %v563
    %605 = vmatprep.subr.mxu0 0.0
    %606 = vmatpush2.msra.mxu0 0.0
    %607 = vmatprep.subr.mxu0 0.0
    %608 = vmatpush2.msra.mxu0 0.0
    %609 = vmatprep.subr.mxu0 0.0
    %610 = vmatpush2.msra.mxu0 0.0
    %611 = vmatprep.subr.mxu0 0.0
    %612 = vmatpush2.msra.mxu0 0.0
    %613 = vmatprep.subr.mxu0 0.0
    %614 = vmatpush2.msra.mxu0 0.0
    %615 = vmatprep.subr.mxu0 0.0
    %616 = vmatpush2.msra.mxu0 0.0
    %617 = vmatprep.subr.mxu0 0.0
    %618 = vmatpush2.msra.mxu0 0.0
    %619 = vmatprep.subr.mxu0 0.0
    %620 = vmatpush2.msra.mxu0 0.0
    %621 = vmatprep.subr.mxu0 0.0
    %622 = vmatpush2.msra.mxu0 0.0
    %623 = vmatprep.subr.mxu0 0.0
    %624 = vmatpush2.msra.mxu0 0.0
    %625 = vmatprep.subr.mxu0 0.0
    %626 = vmatpush2.msra.mxu0 0.0
    %627 = vmatprep.subr.mxu0 0.0
    %628 = vmatpush2.msra.mxu0 0.0
    %629 = vmatprep.subr.mxu0 0.0
    %630 = vmatpush2.msra.mxu0 0.0
    %631 = vmatprep.subr.mxu0 0.0
    %632 = vmatpush2.msra.mxu0 0.0
    %633 = vmatprep.subr.mxu0 0.0
    %634 = vmatpush2.msra.mxu0 0.0
    %635 = vmatprep.subr.mxu0 0.0
    %636 = vmatpush2.msra.mxu0 0.0
    %637 = vmatprep.mubr.f32.mxu0 0.0
    %638 = vmatmul.mubr.f32.gmra.mxu0 %v168
    %v639 = vpop.f32.mrf.mxu0
    %v640 = vadd.f32 0.0, %v639
    %v641 = vpop.f32.mrf.mxu0
    %v642 = vadd.f32 0.0, %v641
    %643 = vdwg.mxu0
    %644 = vmatprep.subr.mxu0 0.0
    %645 = vmatpush1.msra.mxu0 0.0
    %646 = vmatprep.subr.mxu0 0.0
    %647 = vmatpush1.msra.mxu0 0.0
    %648 = vmatprep.subr.mxu0 0.0
    %649 = vmatpush1.msra.mxu0 0.0
    %650 = vmatprep.subr.mxu0 0.0
    %651 = vmatpush1.msra.mxu0 0.0
    %652 = vmatprep.subr.mxu0 0.0
    %653 = vmatpush1.msra.mxu0 0.0
    %654 = vmatprep.subr.mxu0 0.0
    %655 = vmatpush1.msra.mxu0 0.0
    %656 = vmatprep.subr.mxu0 0.0
    %657 = vmatpush1.msra.mxu0 0.0
    %658 = vmatprep.subr.mxu0 0.0
    %659 = vmatpush1.msra.mxu0 0.0
    %660 = vmatprep.subr.mxu0 0.0
    %661 = vmatpush1.msra.mxu0 0.0
    %662 = vmatprep.subr.mxu0 0.0
    %663 = vmatpush1.msra.mxu0 0.0
    %664 = vmatprep.subr.mxu0 0.0
    %665 = vmatpush1.msra.mxu0 0.0
    %666 = vmatprep.subr.mxu0 0.0
    %667 = vmatpush1.msra.mxu0 0.0
    %668 = vmatprep.subr.mxu0 0.0
    %669 = vmatpush1.msra.mxu0 0.0
    %670 = vmatprep.subr.mxu0 %v556
    %671 = vmatpush1.msra.mxu0 %v555
    %672 = vmatprep.subr.mxu0 %v548
    %673 = vmatpush1.msra.mxu0 %v547
    %674 = vmatprep.subr.mxu0 %v540
    %675 = vmatpush1.msra.mxu0 %v539
    %676 = vmatprep.subr.mxu0 0.0
    %677 = vmatpush2.msra.mxu0 0.0
    %678 = vmatprep.subr.mxu0 0.0
    %679 = vmatpush2.msra.mxu0 0.0
    %680 = vmatprep.subr.mxu0 0.0
    %681 = vmatpush2.msra.mxu0 0.0
    %682 = vmatprep.subr.mxu0 0.0
    %683 = vmatpush2.msra.mxu0 0.0
    %684 = vmatprep.subr.mxu0 0.0
    %685 = vmatpush2.msra.mxu0 0.0
    %686 = vmatprep.subr.mxu0 0.0
    %687 = vmatpush2.msra.mxu0 0.0
    %688 = vmatprep.subr.mxu0 0.0
    %689 = vmatpush2.msra.mxu0 0.0
    %690 = vmatprep.subr.mxu0 0.0
    %691 = vmatpush2.msra.mxu0 0.0
    %692 = vmatprep.subr.mxu0 0.0
    %693 = vmatpush2.msra.mxu0 0.0
    %694 = vmatprep.subr.mxu0 0.0
    %695 = vmatpush2.msra.mxu0 0.0
    %696 = vmatprep.subr.mxu0 0.0
    %697 = vmatpush2.msra.mxu0 0.0
    %698 = vmatprep.subr.mxu0 0.0
    %699 = vmatpush2.msra.mxu0 0.0
    %700 = vmatprep.subr.mxu0 0.0
    %701 = vmatpush2.msra.mxu0 0.0
    %702 = vmatprep.subr.mxu0 0.0
    %703 = vmatpush2.msra.mxu0 0.0
    %704 = vmatprep.subr.mxu0 0.0
    %705 = vmatpush2.msra.mxu0 0.0
    %706 = vmatprep.subr.mxu0 0.0
    %707 = vmatpush2.msra.mxu0 0.0
    %708 = vmatprep.mubr.f32.mxu0 0.0
    %709 = vmatmul.mubr.f32.gmra.mxu0 %v242
    %v710 = vpop.f32.mrf.mxu0
    %v711 = vadd.f32 %v640, %v710
    %v712 = vpop.f32.mrf.mxu0
    %v713 = vadd.f32 %v642, %v712
    %714 = vdwg.mxu0
    %715 = vrot.lane.b32.xlu0 %v67, 113
    %v716 = vpop.permute.xlu0 %715
    %717 = vrot.lane.b32.xlu0 %v68, 113
    %v718 = vpop.permute.xlu0 %717
    %v719 = vsel %vm319, %v716, %v718
    %v720 = vsel %vm319, %v718, %v716
    %v721 = vmul.f32 %v719, %v325
    %v722 = vmul.f32 %v720, %v329
    %723 = vrot.lane.b32.xlu0 %v67, 112
    %v724 = vpop.permute.xlu0 %723
    %725 = vrot.lane.b32.xlu0 %v68, 112
    %v726 = vpop.permute.xlu0 %725
    %v727 = vsel %vm336, %v724, %v726
    %v728 = vsel %vm336, %v726, %v724
    %v729 = vmul.f32 %v727, %v342
    %v730 = vmul.f32 %v728, %v346
    %731 = vrot.lane.b32.xlu0 %v67, 111
    %v732 = vpop.permute.xlu0 %731
    %733 = vrot.lane.b32.xlu0 %v68, 111
    %v734 = vpop.permute.xlu0 %733
    %v735 = vsel %vm353, %v732, %v734
    %v736 = vsel %vm353, %v734, %v732
    %v737 = vmul.f32 %v735, %v359
    %v738 = vmul.f32 %v736, %v363
    %739 = vmatprep.subr.mxu0 0.0
    %740 = vmatpush1.msra.mxu0 0.0
    %741 = vmatprep.subr.mxu0 0.0
    %742 = vmatpush1.msra.mxu0 0.0
    %743 = vmatprep.subr.mxu0 0.0
    %744 = vmatpush1.msra.mxu0 0.0
    %745 = vmatprep.subr.mxu0 0.0
    %746 = vmatpush1.msra.mxu0 0.0
    %747 = vmatprep.subr.mxu0 0.0
    %748 = vmatpush1.msra.mxu0 0.0
    %749 = vmatprep.subr.mxu0 0.0
    %750 = vmatpush1.msra.mxu0 0.0
    %751 = vmatprep.subr.mxu0 0.0
    %752 = vmatpush1.msra.mxu0 0.0
    %753 = vmatprep.subr.mxu0 0.0
    %754 = vmatpush1.msra.mxu0 0.0
    %755 = vmatprep.subr.mxu0 0.0
    %756 = vmatpush1.msra.mxu0 0.0
    %757 = vmatprep.subr.mxu0 0.0
    %758 = vmatpush1.msra.mxu0 0.0
    %759 = vmatprep.subr.mxu0 0.0
    %760 = vmatpush1.msra.mxu0 0.0
    %761 = vmatprep.subr.mxu0 0.0
    %762 = vmatpush1.msra.mxu0 0.0
    %763 = vmatprep.subr.mxu0 0.0
    %764 = vmatpush1.msra.mxu0 0.0
    %765 = vmatprep.subr.mxu0 %v738
    %766 = vmatpush1.msra.mxu0 %v737
    %767 = vmatprep.subr.mxu0 %v730
    %768 = vmatpush1.msra.mxu0 %v729
    %769 = vmatprep.subr.mxu0 %v722
    %770 = vmatpush1.msra.mxu0 %v721
    %771 = vmatprep.subr.mxu0 0.0
    %772 = vmatpush2.msra.mxu0 0.0
    %773 = vmatprep.subr.mxu0 0.0
    %774 = vmatpush2.msra.mxu0 0.0
    %775 = vmatprep.subr.mxu0 0.0
    %776 = vmatpush2.msra.mxu0 0.0
    %777 = vmatprep.subr.mxu0 0.0
    %778 = vmatpush2.msra.mxu0 0.0
    %779 = vmatprep.subr.mxu0 0.0
    %780 = vmatpush2.msra.mxu0 0.0
    %781 = vmatprep.subr.mxu0 0.0
    %782 = vmatpush2.msra.mxu0 0.0
    %783 = vmatprep.subr.mxu0 0.0
    %784 = vmatpush2.msra.mxu0 0.0
    %785 = vmatprep.subr.mxu0 0.0
    %786 = vmatpush2.msra.mxu0 0.0
    %787 = vmatprep.subr.mxu0 0.0
    %788 = vmatpush2.msra.mxu0 0.0
    %789 = vmatprep.subr.mxu0 0.0
    %790 = vmatpush2.msra.mxu0 0.0
    %791 = vmatprep.subr.mxu0 0.0
    %792 = vmatpush2.msra.mxu0 0.0
    %793 = vmatprep.subr.mxu0 0.0
    %794 = vmatpush2.msra.mxu0 0.0
    %795 = vmatprep.subr.mxu0 0.0
    %796 = vmatpush2.msra.mxu0 0.0
    %797 = vmatprep.subr.mxu0 0.0
    %798 = vmatpush2.msra.mxu0 0.0
    %799 = vmatprep.subr.mxu0 0.0
    %800 = vmatpush2.msra.mxu0 0.0
    %801 = vmatprep.subr.mxu0 0.0
    %802 = vmatpush2.msra.mxu0 0.0
    %803 = vmatprep.mubr.f32.mxu0 0.0
    %804 = vmatmul.mubr.f32.gmra.mxu0 %v367
    %v805 = vpop.f32.mrf.mxu0
    %v806 = vadd.f32 0.0, %v805
    %v807 = vpop.f32.mrf.mxu0
    %v808 = vadd.f32 0.0, %v807
    %809 = vdwg.mxu0
    %v810 = vadd.f32 %v711, %v806
    %v811 = vadd.f32 %v713, %v808
    %v812 = vadd.f32 %v810, %v445
    %v813 = vadd.f32 %v811, %v445
    %v814 = vmax.f32 %v812, 0.0
    %v815 = vmax.f32 %v813, 0.0
    %816 = vmatprep.subr.mxu0 0.0
    %817 = vmatpush1.msra.mxu0 0.0
    %818 = vmatprep.subr.mxu0 0.0
    %819 = vmatpush1.msra.mxu0 0.0
    %820 = vmatprep.subr.mxu0 0.0
    %821 = vmatpush1.msra.mxu0 0.0
    %822 = vmatprep.subr.mxu0 0.0
    %823 = vmatpush1.msra.mxu0 0.0
    %824 = vmatprep.subr.mxu0 0.0
    %825 = vmatpush1.msra.mxu0 0.0
    %826 = vmatprep.subr.mxu0 0.0
    %827 = vmatpush1.msra.mxu0 0.0
    %828 = vmatprep.subr.mxu0 0.0
    %829 = vmatpush1.msra.mxu0 0.0
    %830 = vmatprep.subr.mxu0 0.0
    %831 = vmatpush1.msra.mxu0 0.0
    %832 = vmatprep.subr.mxu0 0.0
    %833 = vmatpush1.msra.mxu0 0.0
    %834 = vmatprep.subr.mxu0 0.0
    %835 = vmatpush1.msra.mxu0 0.0
    %836 = vmatprep.subr.mxu0 0.0
    %837 = vmatpush1.msra.mxu0 0.0
    %838 = vmatprep.subr.mxu0 0.0
    %839 = vmatpush1.msra.mxu0 0.0
    %840 = vmatprep.subr.mxu0 0.0
    %841 = vmatpush1.msra.mxu0 0.0
    %842 = vmatprep.subr.mxu0 0.0
    %843 = vmatpush1.msra.mxu0 0.0
    %844 = vmatprep.subr.mxu0 0.0
    %845 = vmatpush1.msra.mxu0 0.0
    %846 = vmatprep.subr.mxu0 %v815
    %847 = vmatpush1.msra.mxu0 %v814
    %848 = vmatprep.subr.mxu0 0.0
    %849 = vmatpush2.msra.mxu0 0.0
    %850 = vmatprep.subr.mxu0 0.0
    %851 = vmatpush2.msra.mxu0 0.0
    %852 = vmatprep.subr.mxu0 0.0
    %853 = vmatpush2.msra.mxu0 0.0
    %854 = vmatprep.subr.mxu0 0.0
    %855 = vmatpush2.msra.mxu0 0.0
    %856 = vmatprep.subr.mxu0 0.0
    %857 = vmatpush2.msra.mxu0 0.0
    %858 = vmatprep.subr.mxu0 0.0
    %859 = vmatpush2.msra.mxu0 0.0
    %860 = vmatprep.subr.mxu0 0.0
    %861 = vmatpush2.msra.mxu0 0.0
    %862 = vmatprep.subr.mxu0 0.0
    %863 = vmatpush2.msra.mxu0 0.0
    %864 = vmatprep.subr.mxu0 0.0
    %865 = vmatpush2.msra.mxu0 0.0
    %866 = vmatprep.subr.mxu0 0.0
    %867 = vmatpush2.msra.mxu0 0.0
    %868 = vmatprep.subr.mxu0 0.0
    %869 = vmatpush2.msra.mxu0 0.0
    %870 = vmatprep.subr.mxu0 0.0
    %871 = vmatpush2.msra.mxu0 0.0
    %872 = vmatprep.subr.mxu0 0.0
    %873 = vmatpush2.msra.mxu0 0.0
    %874 = vmatprep.subr.mxu0 0.0
    %875 = vmatpush2.msra.mxu0 0.0
    %876 = vmatprep.subr.mxu0 0.0
    %877 = vmatpush2.msra.mxu0 0.0
    %878 = vmatprep.subr.mxu0 0.0
    %879 = vmatpush2.msra.mxu0 0.0
    %880 = vmatprep.mubr.f32.mxu0 0.0
    %881 = vmatmul.mubr.f32.gmra.mxu0 %v458
    %v882 = vpop.f32.mrf.mxu0
    %v883 = vadd.f32 %v454, %v882
    %v884 = vpop.f32.mrf.mxu0
    %v885 = vadd.f32 %v454, %v884
    %886 = vdwg.mxu0
    %s887 = scalar_lea.vmem [#allocation8], 16
    %888 = vst [vmem:[%s887] sm:$0xff] %v883
    %889 = vst [vmem:[%s887 + $0x8] sm:$0xff] %v885
    // Predicated region
    $region38: #{tpu_custom_call.1} parent=1 // pred_check
      _
    $region39: #{tpu_custom_call.1} parent=1 // pred_check_branch
      %891 = sbr.rel (0) target = $region41
    $region40: #{tpu_custom_call.1} parent=1 // pred_region
      %s893 = ssub.s32 512, 512
      %894 = vsyncadd [#allocation4], %s893
      %s895 = sshll.u32 [#allocation8], 4
      %s896 = int_to_ptr.vmem [resolvable:$true] %s895
      %901 = dma.vmem_to_hbm [thread:$0]  %s896, 512, %s6, [#allocation4], 256, 256, 16
    $region41: #{tpu_custom_call.1} parent=1 // pred_fallthru
      _
    // Predicated region
    $region42: #{tpu_custom_call.1} parent=1 // pred_check
      _
    $region43: #{tpu_custom_call.1} parent=1 // pred_check_branch
      %903 = sbr.rel (0) target = $region45
    $region44: #{tpu_custom_call.1} parent=1 // pred_region
      %904 = dma.done [#allocation4], 512
    $region45: #{tpu_custom_call.1} parent=1 // pred_fallthru
      _
    %905 = vsyncpa [#allocation3], 1
    %906 = vsyncpa [#allocation6], 1
    %907 = vsyncpa [#allocation4], 1

</llo_original>
